<compile_context>
chip_gen: v6e
topology: v6e:2x2x1
jax: 0.10.0
libtpu: 0.0.40
codegen_flags: <defaults>
</compile_context>

<pallas_src>
import jax
import jax.numpy as jnp
from jax.experimental import pallas as pl
from jax.experimental.pallas import tpu as pltpu


def _round_up(a, b):
    return ((a + b - 1) // b) * b


def _dimreduction_kernel(x_ref, wt_ref, o_ref):
    # x_ref:  (tn, C)  f32  -> cast to bf16 in-kernel (hidden under the MXU)
    # wt_ref: (C, tm)  bf16 (pre-transposed, lane-dense)
    # o_ref:  (tn, tm) out_dtype
    x = x_ref[...].astype(jnp.bfloat16)
    acc = jnp.dot(x, wt_ref[...], preferred_element_type=jnp.float32)
    o_ref[...] = jnp.maximum(acc, 0.0).astype(o_ref.dtype)


def dim_reduction(x, w, *, tile_n=512, out_dtype=jnp.float32):
    """ReLU(x @ w.T) via Pallas.

    x: [N, C]  (instances x n_channels), float32
    w: [M, C]  (nn.Linear weight layout, bias=False)
    returns [N, M] in out_dtype (default float32, matching the PyTorch module).
    """
    n, c = x.shape
    m, c_w = w.shape
    assert c == c_w, "feature dims must match"

    # Lane-dense weight layout [C, M_pad], bf16 for the MXU.  Padding the
    # (small) weight along M is cheap; x itself is never padded.
    m_pad = _round_up(m, 128)
    w_t = jnp.transpose(w).astype(jnp.bfloat16)
    if m_pad != m:
        w_t = jnp.pad(w_t, ((0, 0), (0, m_pad - m)))

    # N tile: as large as reasonable (amortizes per-grid-step overhead),
    # multiple of 8 (sublane constraint); ragged edge block is masked.
    tn = _round_up(min(tile_n, n), 8)
    grid_n = pl.cdiv(n, tn)

    # M block: keep W^T fully resident when it fits comfortably in VMEM; split
    # into 128-multiples when it is large, or when a single N tile would leave
    # the second TensorCore (v7x) idle.
    tm = m_pad
    max_w_block_bytes = 8 << 20
    while c * tm * 2 > max_w_block_bytes and tm % 256 == 0:
        tm //= 2
    if grid_n < 2 and tm == m_pad and m_pad % 256 == 0:
        tm = m_pad // 2
    grid_m = m_pad // tm

    out_itemsize = jnp.dtype(out_dtype).itemsize
    # Actual HBM traffic: x streamed once (resident across the inner M axis),
    # W^T once total when resident (else once per outer N step), output once.
    w_reads = grid_n if grid_m > 1 else 1
    cost = pl.CostEstimate(
        flops=2 * n * c * m_pad,
        transcendentals=0,
        bytes_accessed=(
            n * c * jnp.dtype(x.dtype).itemsize
            + w_reads * c * m_pad * 2
            + n * m_pad * out_itemsize
        ),
    )

    # Per-step VMEM: double-buffered x (f32) + out, resident W^T block (x2 for
    # safety), plus margin for the in-kernel bf16 copy of x.
    vmem_bytes = (
        2 * tn * c * 4
        + 2 * c * tm * 2
        + 2 * tn * tm * out_itemsize
        + tn * c * 2
        + (2 << 20)
    )
    vmem_limit = int(min(max(vmem_bytes, 16 << 20), 64 << 20))

    y = pl.pallas_call(
        _dimreduction_kernel,
        out_shape=jax.ShapeDtypeStruct((n, m_pad), out_dtype),
        grid_spec=pltpu.PrefetchScalarGridSpec(
            num_scalar_prefetch=0,
            grid=(grid_n, grid_m),  # M inner: x tile stays resident across M.
            in_specs=[
                # x: tile rows, full feature dim; resident across the M axis.
                pl.BlockSpec((tn, c), lambda i, j: (i, 0)),
                # W^T: full feature dim; constant block index when grid_m==1,
                # so it is fetched from HBM exactly once.
                pl.BlockSpec((c, tm), lambda i, j: (0, j)),
            ],
            out_specs=pl.BlockSpec((tn, tm), lambda i, j: (i, j)),
        ),
        compiler_params=pltpu.CompilerParams(
            dimension_semantics=("parallel", "parallel"),
            vmem_limit_bytes=vmem_limit,
        ),
        cost_estimate=cost,
    )(x, w_t)

    if m_pad != m:
        y = y[:, :m]
    return y


if __name__ == "__main__":
    key = jax.random.PRNGKey(0)

    def make_inputs(k, n, c, m):
        kx, kw = jax.random.split(k)
        x = jax.random.normal(kx, (n, c), dtype=jnp.float32)
        # Deterministic init mimicking nn.Linear's uniform(-1/sqrt(C), 1/sqrt(C)).
        bound = 1.0 / (c ** 0.5)
        w = jax.random.uniform(
            kw, (m, c), dtype=jnp.float32, minval=-bound, maxval=bound
        )
        return x, w

    def check(x, w, out_dtype=jnp.float32, **kw):
        y = jax.block_until_ready(dim_reduction(x, w, out_dtype=out_dtype, **kw))
        assert y.shape == (x.shape[0], w.shape[0])
        assert y.dtype == jnp.dtype(out_dtype)
        yf = y.astype(jnp.float32)
        # Reference 1: bf16-quantized operands, f32 accumulate (tight match).
        x_q = x.astype(jnp.bfloat16).astype(jnp.float32)
        w_q = w.astype(jnp.bfloat16).astype(jnp.float32)
        ref_bf16 = jnp.maximum(x_q @ w_q.T, 0.0)
        tol = 2e-2 if out_dtype == jnp.bfloat16 else 2e-3
        assert jnp.allclose(yf, ref_bf16, atol=tol, rtol=tol)
        # Reference 2: pure f32 path (loose tolerance due to bf16 operand cast).
        ref_f32 = jnp.maximum(x @ w.T, 0.0)
        assert jnp.allclose(yf, ref_f32, atol=4e-2, rtol=4e-2)

    k0, k1, k2 = jax.random.split(key, 3)

    # Base case, consistent with the module (N instances, n_channels, m_dim).
    x0, w0 = make_inputs(k0, 16, 64, 256)
    check(x0, w0)
    # Same inputs with bf16 output (the v6e/v7x bandwidth option).
    check(x0, w0, out_dtype=jnp.bfloat16)

    # Ragged N (not a multiple of 8), single N tile -> M split into two blocks
    # to keep >=2 parallel grid steps; exercises the edge-block masking path.
    x1, w1 = make_inputs(k1, 37, 64, 256)
    check(x1, w1)

    # Multi-N-tile path with a ragged edge block and non-128-multiple m_dim
    # (resident padded W^T, output sliced back to m).
    x2, w2 = make_inputs(k2, 100, 64, 200)
    check(x2, w2, tile_n=32)

    # TODO(synk): numLayer_Res defaults to 0, so resBlocks is an empty
    # nn.Sequential (no-op); there is nothing further to implement for it.

    print("KERNEL_OK")
</pallas_src>

<mosaic_0001>
module attributes {stable_mosaic.version = 11 : i64} {
  func.func @_dimreduction_kernel(%arg0: i32, %arg1: i32, %arg2: memref<16x64xf32, #tpu.memory_space<vmem>>, %arg3: memref<64x128xbf16, #tpu.memory_space<vmem>>, %arg4: memref<16x128xf32, #tpu.memory_space<vmem>>) attributes {dimension_semantics = [#tpu.dimension_semantics<parallel>, #tpu.dimension_semantics<parallel>], iteration_bounds = array<i64: 1, 2>, scalar_prefetch = 0 : i64, scratch_operands = 0 : i64, tpu.core_type = #tpu.core_type<tc>, window_params = [{transform_indices = @transform_0, window_bounds = array<i64: 16, 64>}, {transform_indices = @transform_1, window_bounds = array<i64: 64, 128>}, {transform_indices = @transform_2, window_bounds = array<i64: 16, 128>}]} {
    %c0 = arith.constant 0 : index
    %c0_0 = arith.constant 0 : index
    %0 = vector.load %arg2[%c0, %c0_0] : memref<16x64xf32, #tpu.memory_space<vmem>>, vector<16x64xf32>
    %1 = arith.truncf %0 : vector<16x64xf32> to vector<16x64xbf16>
    %c0_1 = arith.constant 0 : index
    %c0_2 = arith.constant 0 : index
    %2 = vector.load %arg3[%c0_1, %c0_2] : memref<64x128xbf16, #tpu.memory_space<vmem>>, vector<64x128xbf16>
    %cst = arith.constant dense<0.000000e+00> : vector<16x128xf32>
    %3 = tpu.matmul %1, %2, %cst {dimension_numbers = #tpu.dot_dimension_numbers<[1], [0], [0], [1], [0, 0, 1, 1], [], []>} : vector<16x64xbf16>, vector<64x128xbf16>, vector<16x128xf32> -> vector<16x128xf32>
    %cst_3 = arith.constant 0.000000e+00 : f32
    %4 = vector.broadcast %cst_3 : f32 to vector<16x128xf32>
    %5 = arith.maximumf %3, %4 : vector<16x128xf32>
    %c0_4 = arith.constant 0 : index
    %c0_5 = arith.constant 0 : index
    %6 = vector.load %arg4[%c0_4, %c0_5] : memref<16x128xf32, #tpu.memory_space<vmem>>, vector<16x128xf32>
    tpu.vector_store %arg4[%c0_4, %c0_5], %5 {strides = array<i32>} : memref<16x128xf32, #tpu.memory_space<vmem>>, vector<16x128xf32>,
    return
  }
  func.func @transform_0(%arg0: i32, %arg1: i32) -> (i32, i32) {
    %c0_i32 = arith.constant 0 : i32
    %c0_i32_0 = arith.constant 0 : i32
    return %arg0, %c0_i32 : i32, i32
  }
  func.func @transform_1(%arg0: i32, %arg1: i32) -> (i32, i32) {
    %c0_i32 = arith.constant 0 : i32
    %c0_i32_0 = arith.constant 0 : i32
    return %c0_i32, %arg1 : i32, i32
  }
  func.func @transform_2(%arg0: i32, %arg1: i32) -> (i32, i32) {
    %c0_i32 = arith.constant 0 : i32
    return %arg0, %arg1 : i32, i32
  }
}

</mosaic_0001>

<llo_original>
// kernel: tpu_custom_call.1
$region0: #{tpu_custom_call.1}
  #allocation0 [shape = 'u32[]', space=smem, size = 0x4, offset = 0x4, fixed_abs, tag = 'smem constant byte address 0x4 - core index']
  #allocation1 [shape = 'u32[144,128]{1,0:T(1,128)}', space=vmem, size = 0x12000, scoped, tag = 'internal scratch']
  %s0 = inlined_call_operand.hbm [shape: f32[16,64], index: 0, kind: input, shape index: {}]
  %s1 = inlined_call_operand.hbm [shape: bf16[64,256], index: 1, kind: input, shape index: {}]
  %s2 = inlined_call_operand.hbm [shape: f32[16,256], index: 2, kind: output, shape index: {}]
  %s3 = sld [smem:[#allocation0]]
  $region49: #{tpu_custom_call.1} parent=0
    _
  %s5 = ssub.s32 1, %s3
  %s6 = scalar_select 0, %s5, %s3
  $region1: #{tpu_custom_call.1} parent=0
    #allocation2 [shape = 'u8[8192]{0}', space=vmem, size = 0x2000, scoped, tag = 'input window, operand 0, single buffered']
    #allocation3 [shape = 's32[2]{0}', space=sflag, size = 0x8, scoped, tag = 'scoped memory for tpu_custom_call.1']
    #allocation4 [shape = 's32[2]{0}', space=sflag, size = 0x8, scoped, tag = 'scoped memory for tpu_custom_call.1']
    #allocation5 [shape = 'u8[32768]{0}', space=vmem, size = 0x8000, scoped, tag = 'input window, operand 1']
    #allocation6 [shape = 's32[2]{0}', space=sflag, size = 0x8, scoped, tag = 'scoped memory for tpu_custom_call.1']
    #allocation7 [shape = 'u8[16384]{0}', space=vmem, size = 0x4000, scoped, tag = 'output window, operand 0']
    %7 = vsyncpa [#allocation3], 0
    %8 = vsyncpa [#allocation6], 0
    %s9 = scalar_lea.sflag [#allocation6], 1
    %10 = vsyncpa %s9, 0
    %11 = vsyncpa [#allocation4], 0
    %s12 = scalar_lea.sflag [#allocation4], 1
    %13 = vsyncpa %s12, 0
    loop: start=0, step=1, limit=4
    $region2: #{tpu_custom_call.1} parent=1 // loop_pre_header
      _
    $region3: #{tpu_custom_call.1} parent=1 // loop_header
      %s15 = sphi 0, %s19
      %p16 = scmp.ge.s32.totalorder %s15, 4
      %s22 = sphi 0, %s34
      %s23 = sphi 0, %s30
      %s24 = sphi 0, %s22
      %s25 = sphi 0, %s23
      %s26 = sphi 0, %s24
      %s27 = sphi 0, %s25
      %s37 = sphi 0, %s39
      %s40 = sphi 0, %s37
      %s41 = sphi 0, %s40
      %s57 = sphi 0, %s41
      %s63 = sphi 0, %s65
      %s66 = sphi 0, %s63
      %s67 = sphi 0, %s66
      %s83 = sphi 0, %s67
      %s91 = sphi 0, %s93
      %s94 = sphi 0, %s91
      %s95 = sphi 0, %s94
      %s111 = sphi 0, %s95
    $region4: #{tpu_custom_call.1} parent=1 // loop_header_branch
      %18 = sbr.rel (%p16) target = $region8
    $region5: #{tpu_custom_call.1} parent=1 // loop_body
      %s20 = ssub.s32 %s15, 1
      %s21 = ssub.s32 %s15, 2
      %s28 = sadd.s32 1, %s23
      %p29 = scmp.ge.s32.totalorder %s28, 2
      %s30 = scalar_select %p29, 0, %s28
      %s31 = sadd.s32 1, %s22
      %s32 = scalar_select %p29, %s31, %s22
      %p33 = scmp.ge.s32.totalorder %s32, 1
      %s34 = scalar_select %p33, 0, %s32
      %s35 = ssub.s32 %s22, %s34
      %p36 = scmp.eq.s32.totalorder %s35, 0
      %s38 = sadd.s32 %s37, 1
      %s39 = scalar_select %p36, %s37, %s38
      %p42 = pneg %p36
      %p43 = scmp.eq.s32.totalorder %s15, 1
      %p44 = por %p42, %p43
      %p45 = scmp.ne.s32.totalorder %s37, %s40
      %p46 = scmp.eq.s32.totalorder %s15, 0
      %p47 = por %p45, %p46
      %p48 = scmp.ne.s32.totalorder %s37, %s40
      %p49 = scmp.eq.s32.totalorder %s20, 1
      %p50 = por %p48, %p49
      %p51 = scmp.ne.s32.totalorder %s40, %s41
      %p52 = scmp.eq.s32.totalorder %s20, 0
      %p53 = por %p51, %p52
      %p54 = scmp.ne.s32.totalorder %s40, %s41
      %p55 = scmp.eq.s32.totalorder %s21, 1
      %p56 = por %p54, %p55
      %p58 = scmp.ne.s32.totalorder %s41, %s57
      %p59 = scmp.eq.s32.totalorder %s21, 0
      %p60 = por %p58, %p59
      %s61 = ssub.s32 %s23, %s30
      %p62 = scmp.eq.s32.totalorder %s61, 0
      %s64 = sadd.s32 %s63, 1
      %s65 = scalar_select %p62, %s63, %s64
      %p68 = pneg %p62
      %p69 = scmp.eq.s32.totalorder %s15, 1
      %p70 = por %p68, %p69
      %p71 = scmp.ne.s32.totalorder %s63, %s66
      %p72 = scmp.eq.s32.totalorder %s15, 0
      %p73 = por %p71, %p72
      %p74 = scmp.ne.s32.totalorder %s63, %s66
      %p75 = scmp.eq.s32.totalorder %s20, 1
      %p76 = por %p74, %p75
      %p77 = scmp.ne.s32.totalorder %s66, %s67
      %p78 = scmp.eq.s32.totalorder %s20, 0
      %p79 = por %p77, %p78
      %p80 = scmp.ne.s32.totalorder %s66, %s67
      %p81 = scmp.eq.s32.totalorder %s21, 1
      %p82 = por %p80, %p81
      %p84 = scmp.ne.s32.totalorder %s67, %s83
      %p85 = scmp.eq.s32.totalorder %s21, 0
      %p86 = por %p84, %p85
      %s87 = ssub.s32 %s22, %s34
      %s88 = ssub.s32 %s23, %s30
      %s89 = sor.u32 %s87, %s88
      %p90 = scmp.eq.s32.totalorder %s89, 0
      %s92 = sadd.s32 %s91, 1
      %s93 = scalar_select %p90, %s91, %s92
      %p96 = pneg %p90
      %p97 = scmp.eq.s32.totalorder %s15, 1
      %p98 = por %p96, %p97
      %p99 = scmp.ne.s32.totalorder %s91, %s94
      %p100 = scmp.eq.s32.totalorder %s15, 0
      %p101 = por %p99, %p100
      %p102 = scmp.ne.s32.totalorder %s91, %s94
      %p103 = scmp.eq.s32.totalorder %s20, 1
      %p104 = por %p102, %p103
      %p105 = scmp.ne.s32.totalorder %s94, %s95
      %p106 = scmp.eq.s32.totalorder %s20, 0
      %p107 = por %p105, %p106
      %p108 = scmp.ne.s32.totalorder %s94, %s95
      %p109 = scmp.eq.s32.totalorder %s21, 1
      %p110 = por %p108, %p109
      %p112 = scmp.ne.s32.totalorder %s95, %s111
      %p113 = scmp.eq.s32.totalorder %s21, 0
      %p114 = por %p112, %p113
      %p115 = scmp.le.s32.totalorder 1, %s15
      %p116 = scmp.lt.s32.totalorder %s15, 3
      %p117 = pnand %p115, %p116
      %p118 = pneg %p117
      // Predicated region
      $region9: #{tpu_custom_call.1} parent=5 // pred_check
        _
      $region10: #{tpu_custom_call.1} parent=5 // pred_check_branch
        %120 = sbr.rel (%p117) target = $region12
      $region11: #{tpu_custom_call.1} parent=5 // pred_region
        %s121 = ssub.s32 %s15, 1
        // Predicated region
        $region13: #{tpu_custom_call.1} parent=11 // pred_check
          %p122 = pneg %p53
        $region14: #{tpu_custom_call.1} parent=11 // pred_check_branch
          %124 = sbr.rel (%p122) target = $region16
        $region15: #{tpu_custom_call.1} parent=11 // pred_region
          %s125 = smul.u32 2, %s24
          %s127 = ssub.s32 256, 256
          %128 = vsyncadd [#allocation3], %s127
          %s129 = smul.addr %s125, 128
          %s130 = scalar_lea.hbm %s0, %s129
          %s131 = sshll.u32 [#allocation2], 4
          %s132 = int_to_ptr.vmem [resolvable:$true] %s131
          %137 = dma.hbm_to_vmem [thread:$0]  %s130, 256, %s132, [#allocation3], 128, 128, 8
        $region16: #{tpu_custom_call.1} parent=11 // pred_fallthru
          _
      $region12: #{tpu_custom_call.1} parent=5 // pred_fallthru
        _
      %p138 = scmp.lt.s32.totalorder %s15, 2
      // Predicated region
      $region17: #{tpu_custom_call.1} parent=5 // pred_check
        %p139 = pneg %p138
      $region18: #{tpu_custom_call.1} parent=5 // pred_check_branch
        %141 = sbr.rel (%p139) target = $region20
      $region19: #{tpu_custom_call.1} parent=5 // pred_region
        // Predicated region
        $region21: #{tpu_custom_call.1} parent=19 // pred_check
          %p142 = pneg %p73
        $region22: #{tpu_custom_call.1} parent=19 // pred_check_branch
          %144 = sbr.rel (%p142) target = $region24
        $region23: #{tpu_custom_call.1} parent=19 // pred_region
          %s145 = sand.u32 %s63, 1
          %s146 = scalar_lea.sflag [#allocation6], %s145
          %s147 = sand.u32 %s63, 1
          %s148 = smul.addr %s147, 32
          %s149 = scalar_lea.vmem [#allocation5], %s148
          %s151 = ssub.s32 512, 512
          %152 = vsyncadd %s146, %s151
          %s153 = smul.addr %s23, 64
          %s154 = scalar_lea.hbm %s1, %s153
          %s155 = sshll.u32 %s149, 4
          %s156 = int_to_ptr.vmem [resolvable:$true] %s155
          %161 = dma.hbm_to_vmem [thread:$0]  %s154, 512, %s156, %s146, 128, 64, 4
        $region24: #{tpu_custom_call.1} parent=19 // pred_fallthru
          _
      $region20: #{tpu_custom_call.1} parent=5 // pred_fallthru
        _
      %p162 = scmp.le.s32.totalorder 1, %s15
      %p163 = scmp.lt.s32.totalorder %s15, 3
      %p164 = pnand %p162, %p163
      %p165 = pneg %p164
      // Predicated region
      $region25: #{tpu_custom_call.1} parent=5 // pred_check
        _
      $region26: #{tpu_custom_call.1} parent=5 // pred_check_branch
        %167 = sbr.rel (%p164) target = $region28
      $region27: #{tpu_custom_call.1} parent=5 // pred_region
        %s168 = ssub.s32 %s15, 1
        // Predicated region
        $region29: #{tpu_custom_call.1} parent=27 // pred_check
          %p169 = pneg %p53
        $region30: #{tpu_custom_call.1} parent=27 // pred_check_branch
          %171 = sbr.rel (%p169) target = $region32
        $region31: #{tpu_custom_call.1} parent=27 // pred_region
          %172 = dma.done [#allocation3], 256
        $region32: #{tpu_custom_call.1} parent=27 // pred_fallthru
          _
        %s173 = sand.u32 %s66, 1
        %s174 = scalar_lea.sflag [#allocation6], %s173
        %s175 = sand.u32 %s66, 1
        %s176 = smul.addr %s175, 32
        %s177 = scalar_lea.vmem [#allocation5], %s176
        // Predicated region
        $region33: #{tpu_custom_call.1} parent=27 // pred_check
          %p178 = pneg %p79
        $region34: #{tpu_custom_call.1} parent=27 // pred_check_branch
          %180 = sbr.rel (%p178) target = $region36
        $region35: #{tpu_custom_call.1} parent=27 // pred_region
          %181 = dma.done %s174, 512
        $region36: #{tpu_custom_call.1} parent=27 // pred_fallthru
          _
        %p182 = pneg %p53
        %p183 = pneg %p50
        %s184 = sand.u32 %s66, 1
        %s185 = scalar_lea.sflag [#allocation6], %s184
        %s186 = sand.u32 %s66, 1
        %s187 = smul.addr %s186, 32
        %s188 = scalar_lea.vmem [#allocation5], %s187
        %p189 = pneg %p79
        %p190 = pneg %p76
        %p191 = pneg %p107
        %p192 = pneg %p104
        %s193 = sand.u32 %s94, 1
        %s194 = scalar_lea.sflag [#allocation4], %s193
        %s195 = sand.u32 %s94, 1
        %s196 = smul.addr %s195, 16
        %s197 = scalar_lea.vmem [#allocation7], %s196
        %s198 = smul.u32 2, %s24
        %s199 = smul.u32 2, %s24
        %v201 = vld [vmem:[#allocation2] sm:$0xff]
        %v202 = vld [vmem:[#allocation2 + $0x8] sm:$0xff]
        %v203 = vpack.c.bf16 %v202, %v201
        %v204 = vld [vmem:[%s177] sm:$0xf]
        %v205 = vld [vmem:[%s177 + $0x4] sm:$0xf]
        %v206 = vld [vmem:[%s177 + $0x8] sm:$0xf]
        %v207 = vld [vmem:[%s177 + $0xc] sm:$0xf]
        %v208 = vld [vmem:[%s177 + $0x10] sm:$0xf]
        %v209 = vld [vmem:[%s177 + $0x14] sm:$0xf]
        %v210 = vld [vmem:[%s177 + $0x18] sm:$0xf]
        %v211 = vld [vmem:[%s177 + $0x1c] sm:$0xf]
        %v220 = vunpack.c.l.b16 %v204
        %v221 = vunpack.c.l.b16 %v205
        %v222 = vunpack.c.l.b16 %v206
        %v223 = vunpack.c.l.b16 %v207
        %v224 = vunpack.c.l.b16 %v208
        %v225 = vunpack.c.l.b16 %v209
        %v226 = vunpack.c.l.b16 %v210
        %v227 = vunpack.c.l.b16 %v211
        %v228 = vpack.c.b16 %v221, %v220
        %v229 = vpack.c.b16 %v223, %v222
        %v230 = vpack.c.b16 %v225, %v224
        %v231 = vpack.c.b16 %v227, %v226
        %vm236 = vcmask 523264
        %v238 = vsel %vm236, %v203, 0
        %240 = vmatprep.subr.bf16.mxu0 0
        %241 = vmatpush1.bf16.msra.mxu0 0
        %242 = vmatprep.subr.bf16.mxu0 0
        %243 = vmatpush1.bf16.msra.mxu0 0
        %244 = vmatprep.subr.bf16.mxu0 0
        %245 = vmatpush1.bf16.msra.mxu0 0
        %246 = vmatprep.subr.bf16.mxu0 0
        %247 = vmatpush1.bf16.msra.mxu0 0
        %248 = vmatprep.subr.bf16.mxu0 0
        %249 = vmatpush1.bf16.msra.mxu0 %v231
        %250 = vmatprep.subr.bf16.mxu0 0
        %251 = vmatpush1.bf16.msra.mxu0 %v230
        %252 = vmatprep.subr.bf16.mxu0 0
        %253 = vmatpush1.bf16.msra.mxu0 %v229
        %254 = vmatprep.subr.bf16.mxu0 0
        %255 = vmatpush1.bf16.msra.mxu0 %v228
        %256 = vmatprep.subr.bf16.mxu0 0
        %257 = vmatpush2.bf16.msra.mxu0 0
        %258 = vmatprep.subr.bf16.mxu0 0
        %259 = vmatpush2.bf16.msra.mxu0 0
        %260 = vmatprep.subr.bf16.mxu0 0
        %261 = vmatpush2.bf16.msra.mxu0 0
        %262 = vmatprep.subr.bf16.mxu0 0
        %263 = vmatpush2.bf16.msra.mxu0 0
        %264 = vmatprep.subr.bf16.mxu0 0
        %265 = vmatpush2.bf16.msra.mxu0 0
        %266 = vmatprep.subr.bf16.mxu0 0
        %267 = vmatpush2.bf16.msra.mxu0 0
        %268 = vmatprep.subr.bf16.mxu0 0
        %269 = vmatpush2.bf16.msra.mxu0 0
        %270 = vmatprep.subr.bf16.mxu0 0
        %271 = vmatpush2.bf16.msra.mxu0 0
        %272 = vmatprep.mubr.bf16.mxu0 0
        %273 = vmatmul.mubr.bf16.gmra.mxu0 %v238
        %v274 = vpop.f32.mrf.mxu0
        %v275 = vadd.f32 0.0, %v274
        %v276 = vpop.f32.mrf.mxu0
        %v277 = vpop.f32.mrf.mxu0
        %v278 = vadd.f32 0.0, %v277
        %v279 = vpop.f32.mrf.mxu0
        %280 = vdwg.mxu0
        %v281 = vmax.f32 %v275, 0.0
        %v282 = vmax.f32 %v278, 0.0
        %283 = vst [vmem:[%s197] sm:$0xff] %v281
        %284 = vst [vmem:[%s197 + $0x8] sm:$0xff] %v282
        %s285 = sand.u32 %s94, 1
        %s286 = scalar_lea.sflag [#allocation4], %s285
        %s287 = sand.u32 %s94, 1
        %s288 = smul.addr %s287, 16
        %s289 = scalar_lea.vmem [#allocation7], %s288
        // Predicated region
        $region37: #{tpu_custom_call.1} parent=27 // pred_check
          %p290 = pneg %p104
        $region38: #{tpu_custom_call.1} parent=27 // pred_check_branch
          %292 = sbr.rel (%p290) target = $region40
        $region39: #{tpu_custom_call.1} parent=27 // pred_region
          %s293 = smul.u32 2, %s24
          %s295 = ssub.s32 256, 256
          %296 = vsyncadd %s286, %s295
          %s297 = smul.addr %s293, 2
          %s298 = sadd.s32 %s25, %s297
          %s299 = smul.addr %s298, 128
          %s300 = scalar_lea.hbm %s2, %s299
          %s301 = sshll.u32 %s289, 4
          %s302 = int_to_ptr.vmem [resolvable:$true] %s301
          %307 = dma.vmem_to_hbm [thread:$0]  %s302, 256, %s300, %s286, 128, 256, 8
        $region40: #{tpu_custom_call.1} parent=27 // pred_fallthru
          _
      $region28: #{tpu_custom_call.1} parent=5 // pred_fallthru
        _
      %p308 = scmp.le.s32.totalorder 2, %s15
      // Predicated region
      $region41: #{tpu_custom_call.1} parent=5 // pred_check
        %p309 = pneg %p308
      $region42: #{tpu_custom_call.1} parent=5 // pred_check_branch
        %311 = sbr.rel (%p309) target = $region44
      $region43: #{tpu_custom_call.1} parent=5 // pred_region
        %s312 = ssub.s32 %s15, 2
        // Predicated region
        $region45: #{tpu_custom_call.1} parent=43 // pred_check
          %p313 = pneg %p110
        $region46: #{tpu_custom_call.1} parent=43 // pred_check_branch
          %315 = sbr.rel (%p313) target = $region48
        $region47: #{tpu_custom_call.1} parent=43 // pred_region
          %s316 = sand.u32 %s95, 1
          %s317 = scalar_lea.sflag [#allocation4], %s316
          %s318 = sand.u32 %s95, 1
          %s319 = smul.addr %s318, 16
          %s320 = scalar_lea.vmem [#allocation7], %s319
          %321 = dma.done %s317, 256
        $region48: #{tpu_custom_call.1} parent=43 // pred_fallthru
          _
      $region44: #{tpu_custom_call.1} parent=5 // pred_fallthru
        _
    $region6: #{tpu_custom_call.1} parent=1 // loop_footer
      %s19 = sadd.s32 1, %s15
    $region7: #{tpu_custom_call.1} parent=1 // loop_footer_branch
      %14 = sbr.rel target = $region3
    $region8: #{tpu_custom_call.1} parent=1 // loop_exit
      _
    %322 = vsyncpa [#allocation3], 1
    %s323 = scalar_lea.sflag [#allocation3], 1
    %324 = vsyncpa %s323, 1
    %325 = vsyncpa [#allocation6], 1
    %s326 = scalar_lea.sflag [#allocation6], 1
    %327 = vsyncpa %s326, 1
    %328 = vsyncpa [#allocation4], 1
    %s329 = scalar_lea.sflag [#allocation4], 1
    %330 = vsyncpa %s329, 1

</llo_original>
